<compile_context>
chip_gen: v7x
topology: tpu7x:2x2x1
jax: 0.10.0
libtpu: 0.0.40
codegen_flags: <defaults>
</compile_context>

<pallas_src>
import functools

import jax
import jax.numpy as jnp
from jax import lax
from jax.experimental import pallas as pl
from jax.experimental.pallas import tpu as pltpu


# ---------------------------------------------------------------------------
# VMEM budgeting / tile selection helpers
# ---------------------------------------------------------------------------
def _vmem_budget_bytes():
    """~Half of physical VMEM: used as tile budget and scoped-VMEM limit."""
    try:
        cap = int(pltpu.get_tpu_info().vmem_capacity_bytes)
    except Exception:
        cap = 64 * 1024 * 1024  # conservative fallback (v7x per-TC physical)
    return cap // 2


def _round_up(x, m):
    return -(-x // m) * m


def _pick_row_tile(b, bytes_for_tile, budget):
    """Largest MXU-friendly row tile that divides b and fits the VMEM budget.

    256 matches the v6e/v7x 2x256^2 MXU tile (128 matches v5e's 4x128^2);
    starting at 256 keeps MXU efficiency while halving the (t, B) softmax
    intermediate vs. 512.  # TODO(synk): prefer 128 first on v5e.
    """
    candidates = (256, 128, 64, 32, 16, 8)
    for t in candidates:
        if b % t == 0 and bytes_for_tile(t) <= budget:
            return t
    for t in candidates:                      # nothing fits budget: smallest divisor
        if b % t == 0:
            return t
    return b                                  # tiny / odd batch: single block


def _resident_specs(shape):
    """BlockSpecs for a resident (constant-index) block, best first."""
    specs = []
    try:  # single-buffer the constant block (halves its VMEM footprint)
        specs.append(pl.BlockSpec(shape, lambda i: (0, 0),
                                  pipeline_mode=pl.Buffered(1)))
    except Exception:
        pass
    specs.append(pl.BlockSpec(shape, lambda i: (0, 0)))
    return specs


# ---------------------------------------------------------------------------
# Branch 1: in-batch negatives (neg_doc_vec is None)
#   grid = (B // tq,) "parallel" over query-row tiles; full P resident;
#   per-row losses written to a (B, 1) f32 output, mean taken in the wrapper.
# ---------------------------------------------------------------------------
def _inbatch_kernel(q_ref, p_ref, out_ref, *, margin, inv_temp, mxu_dtype):
    i = pl.program_id(0)
    q = q_ref[...]                       # (tq, D) native dtype
    p = p_ref[...]                       # (B,  D) resident keys
    tq = q.shape[0]
    b = p.shape[0]

    # Q_tile @ P^T * (1/temperature): contract on D of both operands (no
    # explicit transpose materialized); MXU fed in mxu_dtype, f32 accumulation.
    sim = lax.dot_general(
        q.astype(mxu_dtype), p.astype(mxu_dtype),
        dimension_numbers=(((1,), (1,)), ((), ())),
        preferred_element_type=jnp.float32) * inv_temp              # (tq, B)

    # Margin applies off-diagonal only (no (B, B) eye multiply).
    rows = lax.broadcasted_iota(jnp.int32, (tq, b), 0) + i * tq
    cols = lax.broadcasted_iota(jnp.int32, (tq, b), 1)
    sim_adj = jnp.where(rows == cols, sim, sim - margin)

    # Stable per-row logsumexp.
    m = jnp.max(sim_adj, axis=-1, keepdims=True)
    lse = jnp.log(jnp.sum(jnp.exp(sim_adj - m), axis=-1, keepdims=True)) + m

    # Diagonal logits recomputed from the aligned rows of the *resident* P
    # block (no duplicated input).  A few-ULP mismatch vs. the MXU row inside
    # `sim` is expected and benign; do NOT "fix" it by gathering from sim
    # (that would be an expensive lane gather).
    row0 = pl.multiple_of(i * tq, tq)
    pf = p_ref[pl.ds(row0, tq), :].astype(jnp.float32)
    qf = q.astype(jnp.float32)
    diag = jnp.sum(qf * pf, axis=-1, keepdims=True) * inv_temp      # (tq, 1)

    out_ref[...] = lse - diag                                       # (tq, 1)


def _inbatch_loss(query_vec, pos_doc_vec, *, margin, temperature, mxu_dtype):
    b, d = query_vec.shape
    isz = jnp.dtype(query_vec.dtype).itemsize
    budget = _vmem_budget_bytes()
    d_pad = _round_up(d, 128)
    b_pad = _round_up(b, 128)

    def tile_bytes(t):
        return (b * d_pad * isz             # resident P keys (single buffer)
                + 2 * t * d_pad * isz       # Q tile, double-buffered
                + 4 * t * b_pad * 4         # sim / sim_adj / exp f32 temps
                + 2 * t * 128 * 4)          # per-row output block (lane padded)

    tq = _pick_row_tile(b, tile_bytes, budget)
    kernel = functools.partial(
        _inbatch_kernel, margin=float(margin),
        inv_temp=1.0 / float(temperature), mxu_dtype=mxu_dtype)

    def build(p_spec):
        return pl.pallas_call(
            kernel,
            out_shape=jax.ShapeDtypeStruct((b, 1), jnp.float32),
            grid=(b // tq,),
            in_specs=[pl.BlockSpec((tq, d), lambda i: (i, 0)),   # Q row tile
                      p_spec],                                   # full keys
            out_specs=pl.BlockSpec((tq, 1), lambda i: (i, 0)),
            compiler_params=pltpu.CompilerParams(
                dimension_semantics=("parallel",),               # rows independent
                vmem_limit_bytes=budget),
        )

    row_loss, last_err = None, None
    for p_spec in _resident_specs((b, d)):
        try:
            row_loss = build(p_spec)(query_vec, pos_doc_vec)
            break
        except Exception as e:    # e.g. Buffered(1) unsupported on this jax
            last_err = e
    if row_loss is None:
        raise last_err
    return jnp.mean(row_loss)


# ---------------------------------------------------------------------------
# Branch 2: explicit negatives (cosine-similarity margin ranking)
#   grid = (B // tb,) "parallel" over batch-row tiles; negatives pre-reshaped
#   to (B, num_neg, D) in the wrapper; per-row hinge written to (B, 1) output.
# ---------------------------------------------------------------------------
def _triplet_kernel(q_ref, p_ref, n_ref, out_ref, *, margin, eps):
    q = q_ref[...]                        # (tb, D)            native dtype
    p = p_ref[...]                        # (tb, D)
    n = n_ref[...]                        # (tb, num_neg, D)   native dtype

    # Inverse norms via rsqrt (EUP slot); clamp mirrors torch's eps floor.
    inv_eps = 1.0 / eps
    q_inv = jnp.minimum(lax.rsqrt(
        jnp.sum(q * q, axis=-1, dtype=jnp.float32, keepdims=True)), inv_eps)   # (tb,1)
    p_inv = jnp.minimum(lax.rsqrt(
        jnp.sum(p * p, axis=-1, dtype=jnp.float32, keepdims=True)), inv_eps)   # (tb,1)
    n_inv = jnp.minimum(lax.rsqrt(
        jnp.sum(n * n, axis=-1, dtype=jnp.float32, keepdims=True)), inv_eps)   # (tb,N,1)

    # Raw dots in the input dtype with f32 accumulation; cosine scaling applied
    # after the D-axis reduction (no f32 upcast / normalization of the
    # (tb, num_neg, D) negatives block is ever materialized).
    pos = jnp.sum(q * p, axis=-1, dtype=jnp.float32,
                  keepdims=True) * (q_inv * p_inv)                              # (tb,1)
    qn = jnp.sum(q[:, None, :] * n, axis=-1, dtype=jnp.float32,
                 keepdims=True)                                                 # (tb,N,1)
    neg = jnp.mean(qn * n_inv, axis=1) * q_inv                                  # (tb,1)

    out_ref[...] = jnp.maximum(margin - pos + neg, 0.0)                         # (tb,1)


def _triplet_loss(query_vec, pos_doc_vec, neg_doc_vec, *, margin, eps=1e-8):
    b, d = query_vec.shape
    bn = neg_doc_vec.shape[0]
    assert bn % b == 0, "neg_doc_vec rows must be a multiple of the batch size"
    num_neg = bn // b
    # Grouping convention (matches torch .view(batch, num_neg, -1)): rows
    # [i*num_neg, (i+1)*num_neg) of neg_doc_vec belong to query i.
    neg3 = neg_doc_vec.reshape(b, num_neg, d)        # free, contiguous view

    isz = jnp.dtype(query_vec.dtype).itemsize
    budget = _vmem_budget_bytes()
    d_pad = _round_up(d, 128)
    nn_pad = _round_up(num_neg, 8)                   # sublane padding of the 3-D block

    def tile_bytes(t):
        return (2 * 2 * t * d_pad * isz              # q + p tiles, double-buffered
                + 2 * t * nn_pad * d_pad * isz       # negatives tile, double-buffered
                + 2 * t * nn_pad * d_pad * isz       # broadcast-product temps
                + 8 * t * 128 * 4)                   # small f32 reductions / output

    tb = _pick_row_tile(b, tile_bytes, budget)
    kernel = functools.partial(_triplet_kernel, margin=float(margin), eps=float(eps))

    row_loss = pl.pallas_call(
        kernel,
        out_shape=jax.ShapeDtypeStruct((b, 1), jnp.float32),
        grid=(b // tb,),
        in_specs=[pl.BlockSpec((tb, d), lambda i: (i, 0)),
                  pl.BlockSpec((tb, d), lambda i: (i, 0)),
                  pl.BlockSpec((tb, num_neg, d), lambda i: (i, 0, 0))],
        out_specs=pl.BlockSpec((tb, 1), lambda i: (i, 0)),
        compiler_params=pltpu.CompilerParams(
            dimension_semantics=("parallel",),
            vmem_limit_bytes=budget),
    )(query_vec, pos_doc_vec, neg3)
    return jnp.mean(row_loss)


# ---------------------------------------------------------------------------
# Python wrapper mirroring MarginRankingLoss.forward
# ---------------------------------------------------------------------------
def margin_ranking_loss(query_vec, pos_doc_vec, neg_doc_vec=None, *,
                        margin=0.2, temperature=0.1, mxu_dtype=None):
    """Pallas TPU port of MarginRankingLoss.forward.

    mxu_dtype: optional dtype the branch-1 matmul operands are cast to before
      the MXU (f32 accumulation preserved).  Pass jnp.bfloat16 for f32 callers
      to get bf16-native MXU throughput (2-4x on v5e/v6e/v7x) at a small
      numerics cost; default None keeps the caller's dtype (exact semantics).
    """
    if neg_doc_vec is None:
        md = jnp.dtype(mxu_dtype) if mxu_dtype is not None else jnp.dtype(query_vec.dtype)
        return _inbatch_loss(query_vec, pos_doc_vec, margin=margin,
                             temperature=temperature, mxu_dtype=md)
    return _triplet_loss(query_vec, pos_doc_vec, neg_doc_vec, margin=margin)


# ---------------------------------------------------------------------------
# Pure-JAX reference (for sanity check)
# ---------------------------------------------------------------------------
def _ref_loss(q, p, n=None, *, margin=0.2, temperature=0.1):
    q = q.astype(jnp.float32)
    p = p.astype(jnp.float32)
    if n is None:
        b = q.shape[0]
        sim = q @ p.T / temperature
        eye = jnp.eye(b, dtype=jnp.float32)
        sim = sim - margin * (1.0 - eye)
        lse = jax.nn.logsumexp(sim, axis=-1)
        return jnp.mean(lse - jnp.diag(sim))
    n = n.astype(jnp.float32)
    b, d = q.shape
    num_neg = n.shape[0] // b
    eps = 1e-8
    qn = jnp.maximum(jnp.linalg.norm(q, axis=-1), eps)
    pn = jnp.maximum(jnp.linalg.norm(p, axis=-1), eps)
    pos = jnp.sum(q * p, -1) / (qn * pn)
    n3 = n.reshape(b, num_neg, d)
    nn = jnp.maximum(jnp.linalg.norm(n3, axis=-1), eps)
    neg = jnp.sum(q[:, None, :] * n3, -1) / (qn[:, None] * nn)
    neg = jnp.mean(neg, axis=1)
    return jnp.mean(jnp.maximum(margin - pos + neg, 0.0))


if __name__ == "__main__":
    key = jax.random.PRNGKey(0)
    kq, kp, kn, kq2, kp2, kn2 = jax.random.split(key, 6)

    # --- tiny config: batch=8, hidden=128, 4 negatives per query ------------
    B, D, N_NEG = 8, 128, 4
    query = jax.random.normal(kq, (B, D), dtype=jnp.float32)
    pos_doc = jax.random.normal(kp, (B, D), dtype=jnp.float32)
    neg_doc = jax.random.normal(kn, (B * N_NEG, D), dtype=jnp.float32)

    loss_inbatch = margin_ranking_loss(query, pos_doc, None,
                                       margin=0.2, temperature=0.1)
    jax.block_until_ready(loss_inbatch)
    ref1 = _ref_loss(query, pos_doc, None, margin=0.2, temperature=0.1)
    assert jnp.allclose(loss_inbatch, ref1, rtol=1e-3, atol=1e-3), (loss_inbatch, ref1)

    loss_triplet = margin_ranking_loss(query, pos_doc, neg_doc,
                                       margin=0.2, temperature=0.1)
    jax.block_until_ready(loss_triplet)
    ref2 = _ref_loss(query, pos_doc, neg_doc, margin=0.2, temperature=0.1)
    assert jnp.allclose(loss_triplet, ref2, rtol=1e-3, atol=1e-4), (loss_triplet, ref2)

    # --- multi-tile config: exercises the parallel row-tiled grid -----------
    B2, D2, N2 = 24, 128, 3            # tq/tb=8 -> 3 grid steps
    q2 = jax.random.normal(kq2, (B2, D2), dtype=jnp.float32)
    p2 = jax.random.normal(kp2, (B2, D2), dtype=jnp.float32)
    n2 = jax.random.normal(kn2, (B2 * N2, D2), dtype=jnp.float32)

    l3 = margin_ranking_loss(q2, p2, None)
    l4 = margin_ranking_loss(q2, p2, n2)
    jax.block_until_ready((l3, l4))
    assert jnp.allclose(l3, _ref_loss(q2, p2, None), rtol=1e-3, atol=1e-3), l3
    assert jnp.allclose(l4, _ref_loss(q2, p2, n2), rtol=1e-3, atol=1e-4), l4

    # --- opt-in bf16 MXU feeding for f32 callers (looser tolerance) ---------
    l5 = margin_ranking_loss(query, pos_doc, None, mxu_dtype=jnp.bfloat16)
    jax.block_until_ready(l5)
    assert jnp.allclose(l5, ref1, rtol=2e-2, atol=1e-1), (l5, ref1)

    print("KERNEL_OK")
</pallas_src>

<mosaic_0001>
module attributes {stable_mosaic.version = 11 : i64} {
  func.func @_inbatch_kernel(%arg0: i32, %arg1: memref<8x128xf32, #tpu.memory_space<vmem>>, %arg2: memref<8x128xf32, #tpu.memory_space<vmem>>, %arg3: memref<8x1xf32, #tpu.memory_space<vmem>>) attributes {dimension_semantics = [#tpu.dimension_semantics<parallel>], iteration_bounds = array<i64: 1>, scalar_prefetch = 0 : i64, scratch_operands = 0 : i64, tpu.core_type = #tpu.core_type<tc>, window_params = [{transform_indices = @transform_0, window_bounds = array<i64: 8, 128>}, {pipeline_mode = #tpu.pipeline_mode<synchronous>, transform_indices = @transform_1, window_bounds = array<i64: 8, 128>}, {transform_indices = @transform_2, window_bounds = array<i64: 8, 1>}]} {
    %c0 = arith.constant 0 : index
    %c0_0 = arith.constant 0 : index
    %0 = vector.load %arg1[%c0, %c0_0] : memref<8x128xf32, #tpu.memory_space<vmem>>, vector<8x128xf32>
    %c0_1 = arith.constant 0 : index
    %c0_2 = arith.constant 0 : index
    %1 = vector.load %arg2[%c0_1, %c0_2] : memref<8x128xf32, #tpu.memory_space<vmem>>, vector<8x128xf32>
    %cst = arith.constant dense<0.000000e+00> : vector<8x8xf32>
    %2 = tpu.matmul %0, %1, %cst {dimension_numbers = #tpu.dot_dimension_numbers<[1], [1], [0], [0], [0, 0, 1, 0], [], []>} : vector<8x128xf32>, vector<8x128xf32>, vector<8x8xf32> -> vector<8x8xf32>
    %cst_3 = arith.constant 1.000000e+01 : f32
    %3 = vector.broadcast %cst_3 : f32 to vector<8x8xf32>
    %4 = arith.mulf %2, %3 : vector<8x8xf32>
    %5 = tpu.iota {dimensions = array<i32: 0>} : vector<8x8xi32>
    %c8_i32 = arith.constant 8 : i32
    %6 = arith.muli %arg0, %c8_i32 : i32
    %7 = vector.broadcast %6 : i32 to vector<8x8xi32>
    %8 = arith.addi %5, %7 : vector<8x8xi32>
    %9 = tpu.iota {dimensions = array<i32: 1>} : vector<8x8xi32>
    %10 = arith.cmpi eq, %8, %9 : vector<8x8xi32>
    %cst_4 = arith.constant 2.000000e-01 : f32
    %11 = vector.broadcast %cst_4 : f32 to vector<8x8xf32>
    %12 = arith.subf %4, %11 : vector<8x8xf32>
    %13 = arith.select %10, %4, %12 : vector<8x8xi1>, vector<8x8xf32>
    %cst_5 = arith.constant dense<0xFF800000> : vector<8xf32>
    %14 = vector.multi_reduction <maximumf>, %13, %cst_5 [1] : vector<8x8xf32> to vector<8xf32>
    %15 = vector.shape_cast %14 : vector<8xf32> to vector<8x1xf32>
    %16 = vector.broadcast %15 : vector<8x1xf32> to vector<8x8xf32>
    %17 = arith.subf %13, %16 : vector<8x8xf32>
    %18 = math.exp %17 : vector<8x8xf32>
    %cst_6 = arith.constant dense<0.000000e+00> : vector<8xf32>
    %19 = vector.multi_reduction <add>, %18, %cst_6 [1] : vector<8x8xf32> to vector<8xf32>
    %20 = vector.shape_cast %19 : vector<8xf32> to vector<8x1xf32>
    %21 = math.log %20 : vector<8x1xf32>
    %22 = arith.addf %21, %15 : vector<8x1xf32>
    %c8_i32_7 = arith.constant 8 : i32
    %23 = arith.muli %arg0, %c8_i32_7 : i32
    %24 = tpu.assume_multiple %23, 8 : i32
    %25 = arith.index_cast %24 : i32 to index
    %c0_8 = arith.constant 0 : index
    %26 = vector.load %arg2[%25, %c0_8] : memref<8x128xf32, #tpu.memory_space<vmem>>, vector<8x128xf32>
    %27 = arith.mulf %0, %26 : vector<8x128xf32>
    %cst_9 = arith.constant dense<0.000000e+00> : vector<8xf32>
    %28 = vector.multi_reduction <add>, %27, %cst_9 [1] : vector<8x128xf32> to vector<8xf32>
    %29 = vector.shape_cast %28 : vector<8xf32> to vector<8x1xf32>
    %cst_10 = arith.constant 1.000000e+01 : f32
    %30 = vector.broadcast %cst_10 : f32 to vector<8x1xf32>
    %31 = arith.mulf %29, %30 : vector<8x1xf32>
    %32 = arith.subf %22, %31 : vector<8x1xf32>
    %c0_11 = arith.constant 0 : index
    %c0_12 = arith.constant 0 : index
    %33 = vector.load %arg3[%c0_11, %c0_12] : memref<8x1xf32, #tpu.memory_space<vmem>>, vector<8x1xf32>
    tpu.vector_store %arg3[%c0_11, %c0_12], %32 {strides = array<i32>} : memref<8x1xf32, #tpu.memory_space<vmem>>, vector<8x1xf32>,
    return
  }
  func.func @transform_0(%arg0: i32) -> (i32, i32) {
    %c0_i32 = arith.constant 0 : i32
    %c0_i32_0 = arith.constant 0 : i32
    return %arg0, %c0_i32 : i32, i32
  }
  func.func @transform_1(%arg0: i32) -> (i32, i32) {
    %c0_i32 = arith.constant 0 : i32
    %c0_i32_0 = arith.constant 0 : i32
    %c0_i32_1 = arith.constant 0 : i32
    return %c0_i32, %c0_i32_0 : i32, i32
  }
  func.func @transform_2(%arg0: i32) -> (i32, i32) {
    %c0_i32 = arith.constant 0 : i32
    %c0_i32_0 = arith.constant 0 : i32
    return %arg0, %c0_i32 : i32, i32
  }
}

module attributes {stable_mosaic.version = 11 : i64} {
  func.func @_inbatch_kernel(%arg0: i32, %arg1: memref<8x128xf32, #tpu.memory_space<vmem>>, %arg2: memref<8x128xf32, #tpu.memory_space<vmem>>, %arg3: memref<8x1xf32, #tpu.memory_space<vmem>>) attributes {dimension_semantics = [#tpu.dimension_semantics<parallel>], iteration_bounds = array<i64: 1>, scalar_prefetch = 0 : i64, scratch_operands = 0 : i64, tpu.core_type = #tpu.core_type<tc>, window_params = [{transform_indices = @transform_0, window_bounds = array<i64: 8, 128>}, {pipeline_mode = #tpu.pipeline_mode<synchronous>, transform_indices = @transform_1, window_bounds = array<i64: 8, 128>}, {transform_indices = @transform_2, window_bounds = array<i64: 8, 1>}]} {
    %c0 = arith.constant 0 : index
    %c0_0 = arith.constant 0 : index
    %0 = vector.load %arg1[%c0, %c0_0] : memref<8x128xf32, #tpu.memory_space<vmem>>, vector<8x128xf32>
    %c0_1 = arith.constant 0 : index
    %c0_2 = arith.constant 0 : index
    %1 = vector.load %arg2[%c0_1, %c0_2] : memref<8x128xf32, #tpu.memory_space<vmem>>, vector<8x128xf32>
    %cst = arith.constant dense<0.000000e+00> : vector<8x8xf32>
    %2 = tpu.matmul %0, %1, %cst {dimension_numbers = #tpu.dot_dimension_numbers<[1], [1], [0], [0], [0, 0, 1, 0], [], []>} : vector<8x128xf32>, vector<8x128xf32>, vector<8x8xf32> -> vector<8x8xf32>
    %cst_3 = arith.constant 1.000000e+01 : f32
    %3 = vector.broadcast %cst_3 : f32 to vector<8x8xf32>
    %4 = arith.mulf %2, %3 : vector<8x8xf32>
    %5 = tpu.iota {dimensions = array<i32: 0>} : vector<8x8xi32>
    %c8_i32 = arith.constant 8 : i32
    %6 = arith.muli %arg0, %c8_i32 : i32
    %7 = vector.broadcast %6 : i32 to vector<8x8xi32>
    %8 = arith.addi %5, %7 : vector<8x8xi32>
    %9 = tpu.iota {dimensions = array<i32: 1>} : vector<8x8xi32>
    %10 = arith.cmpi eq, %8, %9 : vector<8x8xi32>
    %cst_4 = arith.constant 2.000000e-01 : f32
    %11 = vector.broadcast %cst_4 : f32 to vector<8x8xf32>
    %12 = arith.subf %4, %11 : vector<8x8xf32>
    %13 = arith.select %10, %4, %12 : vector<8x8xi1>, vector<8x8xf32>
    %cst_5 = arith.constant dense<0xFF800000> : vector<8xf32>
    %14 = vector.multi_reduction <maximumf>, %13, %cst_5 [1] : vector<8x8xf32> to vector<8xf32>
    %15 = vector.shape_cast %14 : vector<8xf32> to vector<8x1xf32>
    %16 = vector.broadcast %15 : vector<8x1xf32> to vector<8x8xf32>
    %17 = arith.subf %13, %16 : vector<8x8xf32>
    %18 = math.exp %17 : vector<8x8xf32>
    %cst_6 = arith.constant dense<0.000000e+00> : vector<8xf32>
    %19 = vector.multi_reduction <add>, %18, %cst_6 [1] : vector<8x8xf32> to vector<8xf32>
    %20 = vector.shape_cast %19 : vector<8xf32> to vector<8x1xf32>
    %21 = math.log %20 : vector<8x1xf32>
    %22 = arith.addf %21, %15 : vector<8x1xf32>
    %c8_i32_7 = arith.constant 8 : i32
    %23 = arith.muli %arg0, %c8_i32_7 : i32
    %24 = tpu.assume_multiple %23, 8 : i32
    %25 = arith.index_cast %24 : i32 to index
    %c0_8 = arith.constant 0 : index
    %26 = vector.load %arg2[%25, %c0_8] : memref<8x128xf32, #tpu.memory_space<vmem>>, vector<8x128xf32>
    %27 = arith.mulf %0, %26 : vector<8x128xf32>
    %cst_9 = arith.constant dense<0.000000e+00> : vector<8xf32>
    %28 = vector.multi_reduction <add>, %27, %cst_9 [1] : vector<8x128xf32> to vector<8xf32>
    %29 = vector.shape_cast %28 : vector<8xf32> to vector<8x1xf32>
    %cst_10 = arith.constant 1.000000e+01 : f32
    %30 = vector.broadcast %cst_10 : f32 to vector<8x1xf32>
    %31 = arith.mulf %29, %30 : vector<8x1xf32>
    %32 = arith.subf %22, %31 : vector<8x1xf32>
    %c0_11 = arith.constant 0 : index
    %c0_12 = arith.constant 0 : index
    %33 = vector.load %arg3[%c0_11, %c0_12] : memref<8x1xf32, #tpu.memory_space<vmem>>, vector<8x1xf32>
    tpu.vector_store %arg3[%c0_11, %c0_12], %32 {strides = array<i32>} : memref<8x1xf32, #tpu.memory_space<vmem>>, vector<8x1xf32>,
    return
  }
  func.func @transform_0(%arg0: i32) -> (i32, i32) {
    %c0_i32 = arith.constant 0 : i32
    %c0_i32_0 = arith.constant 0 : i32
    return %arg0, %c0_i32 : i32, i32
  }
  func.func @transform_1(%arg0: i32) -> (i32, i32) {
    %c0_i32 = arith.constant 0 : i32
    %c0_i32_0 = arith.constant 0 : i32
    %c0_i32_1 = arith.constant 0 : i32
    return %c0_i32, %c0_i32_0 : i32, i32
  }
  func.func @transform_2(%arg0: i32) -> (i32, i32) {
    %c0_i32 = arith.constant 0 : i32
    %c0_i32_0 = arith.constant 0 : i32
    return %arg0, %c0_i32 : i32, i32
  }
}

</mosaic_0001>

<llo_original>
// kernel: tpu_custom_call.1
$region0: #{tpu_custom_call.1}
  #allocation0 [shape = 'u32[]', space=smem, size = 0x4, offset = 0x4, fixed_abs, tag = 'smem constant byte address 0x4 - core index']
  #allocation1 [shape = 'u32[144,128]{1,0:T(1,128)}', space=vmem, size = 0x12000, scoped, tag = 'internal scratch']
  %s0 = inlined_call_operand.hbm [shape: f32[8,128], index: 0, kind: input, shape index: {}]
  %s1 = inlined_call_operand.hbm [shape: f32[8,128], index: 1, kind: input, shape index: {}]
  %s2 = inlined_call_operand.vmem [shape: f32[8,1], index: 2, kind: output, shape index: {}]
  %s3 = sld [smem:[#allocation0]]
  $region26: #{tpu_custom_call.1} parent=0
    _
  %s5 = ssub.s32 1, %s3
  %s6 = scalar_select 0, %s5, %s3
  $region1: #{tpu_custom_call.1} parent=0
    #allocation2 [shape = 'u8[4096]{0}', space=vmem, size = 0x1000, scoped, tag = 'input window, operand 0, single buffered']
    #allocation3 [shape = 's32[1]{0}', space=sflag, size = 0x4, scoped, tag = 'scoped memory for tpu_custom_call.1']
    #allocation4 [shape = 'u8[4096]{0}', space=vmem, size = 0x1000, scoped, tag = 'input window, operand 1, single buffered']
    #allocation5 [shape = 's32[1]{0}', space=sflag, size = 0x4, scoped, tag = 'scoped memory for tpu_custom_call.1']
    %7 = vsyncpa [#allocation3], 0
    %8 = vsyncpa [#allocation5], 0
    // Predicated region
    $region2: #{tpu_custom_call.1} parent=1 // pred_check
      _
    $region3: #{tpu_custom_call.1} parent=1 // pred_check_branch
      %10 = sbr.rel (0) target = $region5
    $region4: #{tpu_custom_call.1} parent=1 // pred_region
      %s12 = ssub.s32 128, 128
      %13 = vsyncadd [#allocation3], %s12
      %s15 = sshll.u32 [#allocation2], 4
      %s16 = int_to_ptr.vmem [resolvable:$true] %s15
      %18 = dma.hbm_to_vmem [thread:$0]  %s0, 128, %s16, [#allocation3]
    $region5: #{tpu_custom_call.1} parent=1 // pred_fallthru
      _
    // Predicated region
    $region6: #{tpu_custom_call.1} parent=1 // pred_check
      _
    $region7: #{tpu_custom_call.1} parent=1 // pred_check_branch
      %20 = sbr.rel (0) target = $region9
    $region8: #{tpu_custom_call.1} parent=1 // pred_region
      %s22 = ssub.s32 128, 128
      %23 = vsyncadd [#allocation5], %s22
      %s25 = sshll.u32 [#allocation4], 4
      %s26 = int_to_ptr.vmem [resolvable:$true] %s25
      %28 = dma.hbm_to_vmem [thread:$0]  %s1, 128, %s26, [#allocation5]
    $region9: #{tpu_custom_call.1} parent=1 // pred_fallthru
      _
    // Predicated region
    $region10: #{tpu_custom_call.1} parent=1 // pred_check
      _
    $region11: #{tpu_custom_call.1} parent=1 // pred_check_branch
      %30 = sbr.rel (0) target = $region13
    $region12: #{tpu_custom_call.1} parent=1 // pred_region
      %31 = dma.done [#allocation3], 128
    $region13: #{tpu_custom_call.1} parent=1 // pred_fallthru
      _
    // Predicated region
    $region14: #{tpu_custom_call.1} parent=1 // pred_check
      _
    $region15: #{tpu_custom_call.1} parent=1 // pred_check_branch
      %33 = sbr.rel (0) target = $region17
    $region16: #{tpu_custom_call.1} parent=1 // pred_region
      %34 = dma.done [#allocation5], 128
    $region17: #{tpu_custom_call.1} parent=1 // pred_fallthru
      _
    %v35 = vld [vmem:[#allocation2] sm:$0xff]
    %v36 = vld [vmem:[#allocation4] sm:$0xff]
    %37 = vmatprep.subr.mxu0 0.0
    %38 = vmatpush1.xpose.msra.mxu0 %v36
    %39 = vmatprep.subr.mxu0 0.0
    %40 = vmatpush1.xpose.msra.mxu0 0.0
    %41 = vmatprep.subr.mxu0 0.0
    %42 = vmatpush1.xpose.msra.mxu0 0.0
    %43 = vmatprep.subr.mxu0 0.0
    %44 = vmatpush1.xpose.msra.mxu0 0.0
    %45 = vmatprep.subr.mxu0 0.0
    %46 = vmatpush1.xpose.msra.mxu0 0.0
    %47 = vmatprep.subr.mxu0 0.0
    %48 = vmatpush1.xpose.msra.mxu0 0.0
    %49 = vmatprep.subr.mxu0 0.0
    %50 = vmatpush1.xpose.msra.mxu0 0.0
    %51 = vmatprep.subr.mxu0 0.0
    %52 = vmatpush1.xpose.msra.mxu0 0.0
    %53 = vmatprep.subr.mxu0 0.0
    %54 = vmatpush1.xpose.msra.mxu0 0.0
    %55 = vmatprep.subr.mxu0 0.0
    %56 = vmatpush1.xpose.msra.mxu0 0.0
    %57 = vmatprep.subr.mxu0 0.0
    %58 = vmatpush1.xpose.msra.mxu0 0.0
    %59 = vmatprep.subr.mxu0 0.0
    %60 = vmatpush1.xpose.msra.mxu0 0.0
    %61 = vmatprep.subr.mxu0 0.0
    %62 = vmatpush1.xpose.msra.mxu0 0.0
    %63 = vmatprep.subr.mxu0 0.0
    %64 = vmatpush1.xpose.msra.mxu0 0.0
    %65 = vmatprep.subr.mxu0 0.0
    %66 = vmatpush1.xpose.msra.mxu0 0.0
    %67 = vmatprep.subr.mxu0 0.0
    %68 = vmatpush1.xpose.msra.mxu0 0.0
    %69 = vmatprep.subr.mxu0 0.0
    %70 = vmatpush1.xpose.msra.mxu0 0.0
    %71 = vmatprep.subr.mxu0 0.0
    %72 = vmatpush1.xpose.msra.mxu0 0.0
    %73 = vmatprep.subr.mxu0 0.0
    %74 = vmatpush1.xpose.msra.mxu0 0.0
    %75 = vmatprep.subr.mxu0 0.0
    %76 = vmatpush1.xpose.msra.mxu0 0.0
    %77 = vmatprep.subr.mxu0 0.0
    %78 = vmatpush1.xpose.msra.mxu0 0.0
    %79 = vmatprep.subr.mxu0 0.0
    %80 = vmatpush1.xpose.msra.mxu0 0.0
    %81 = vmatprep.subr.mxu0 0.0
    %82 = vmatpush1.xpose.msra.mxu0 0.0
    %83 = vmatprep.subr.mxu0 0.0
    %84 = vmatpush1.xpose.msra.mxu0 0.0
    %85 = vmatprep.subr.mxu0 0.0
    %86 = vmatpush1.xpose.msra.mxu0 0.0
    %87 = vmatprep.subr.mxu0 0.0
    %88 = vmatpush1.xpose.msra.mxu0 0.0
    %89 = vmatprep.subr.mxu0 0.0
    %90 = vmatpush1.xpose.msra.mxu0 0.0
    %91 = vmatprep.subr.mxu0 0.0
    %92 = vmatpush1.xpose.msra.mxu0 0.0
    %93 = vmatprep.subr.mxu0 0.0
    %94 = vmatpush1.xpose.msra.mxu0 0.0
    %95 = vmatprep.subr.mxu0 0.0
    %96 = vmatpush1.xpose.msra.mxu0 0.0
    %97 = vmatprep.subr.mxu0 0.0
    %98 = vmatpush1.xpose.msra.mxu0 0.0
    %99 = vmatprep.subr.mxu0 0.0
    %100 = vmatpush1.xpose.msra.mxu0 0.0
    %101 = vmatprep.mubr.f32.mxu0 0.0
    %102 = vmatmul.mubr.f32.gmra.mrb[0].mxu0 %v35
    %v103 = vpop.f32.mrb[0].mxu0
    %v104 = vadd.f32 0.0, %v103
    %v105 = vpop.f32.mrb[0].mxu0
    %106 = vdwg.mxu0
    %v107 = vmul.f32 %v104, 10.0
    %v108 = vlaneseq
    %v109 = vshrl.u32 %v108, 7
    %s110 = smul.u32 0, 8
    %v111 = vstv %s110
    %v112 = vadd.s32 %v109, %v111
    %v113 = vlaneseq
    %v114 = vand.u32 %v113, 127
    %vm115 = vcmp.eq.s32.totalorder %v112, %v114
    %v116 = vsub.f32 %v107, 0.2
    %v117 = vsel %vm115, %v107, %v116
    %vm118 = vcmask 64512
    %v119 = vsel %vm118, %v117, -inf
    %120 = vmax.xlane.f32.xlu0 %v119
    %v121 = vpop.xlane.xlu0 %120
    %v122 = vsub.f32 %v117, %v121
    %v123 = vmul.f32 %v122, 1.442695
    %v124 = vpow.pop %v123
    %v125 = vsel %vm118, %v124, 0.0
    %126 = vadd.xlane.f32.xlu0 %v125
    %v127 = vpop.xlane.xlu0 %126
    %v128 = vlog2.pop %v127
    %v129 = vmul.f32 %v128, 0.6931472
    %v130 = vadd.f32 %v129, %v121
    %s131 = scalar_lea.vmem [#allocation4], %s110
    %v132 = vld [vmem:[%s131] sm:$0xff]
    %v133 = vmul.f32 %v35, %v132
    %134 = vadd.xlane.f32.xlu0 %v133
    %v135 = vpop.xlane.xlu0 %134
    %v136 = vmul.f32 %v135, 10.0
    %v137 = vsub.f32 %v130, %v136
    %vm138 = vcmask 7168
    %139 = vst.msk [vmem:[%s2] sm:$0xff] %vm138, %v137
    // Predicated region
    $region18: #{tpu_custom_call.1} parent=1 // pred_check
      _
    $region19: #{tpu_custom_call.1} parent=1 // pred_check_branch
      %141 = sbr.rel (0) target = $region21
    $region20: #{tpu_custom_call.1} parent=1 // pred_region
      _
    $region21: #{tpu_custom_call.1} parent=1 // pred_fallthru
      _
    // Predicated region
    $region22: #{tpu_custom_call.1} parent=1 // pred_check
      _
    $region23: #{tpu_custom_call.1} parent=1 // pred_check_branch
      %143 = sbr.rel (0) target = $region25
    $region24: #{tpu_custom_call.1} parent=1 // pred_region
      _
    $region25: #{tpu_custom_call.1} parent=1 // pred_fallthru
      _
    %144 = vsyncpa [#allocation3], 1
    %145 = vsyncpa [#allocation5], 1

// kernel: tpu_custom_call.1
$region0: #{tpu_custom_call.1}
  #allocation0 [shape = 'u32[]', space=smem, size = 0x4, offset = 0x4, fixed_abs, tag = 'smem constant byte address 0x4 - core index']
  #allocation1 [shape = 'u32[144,128]{1,0:T(1,128)}', space=vmem, size = 0x12000, scoped, tag = 'internal scratch']
  %s0 = inlined_call_operand.hbm [shape: f32[8,128], index: 0, kind: input, shape index: {}]
  %s1 = inlined_call_operand.hbm [shape: f32[8,128], index: 1, kind: input, shape index: {}]
  %s2 = inlined_call_operand.vmem [shape: f32[8,1], index: 2, kind: output, shape index: {}]
  %s3 = sld [smem:[#allocation0]]
  $region26: #{tpu_custom_call.1} parent=0
    _
  %s5 = ssub.s32 1, %s3
  %s6 = scalar_select 0, %s5, %s3
  $region1: #{tpu_custom_call.1} parent=0
    #allocation2 [shape = 'u8[4096]{0}', space=vmem, size = 0x1000, scoped, tag = 'input window, operand 0, single buffered']
    #allocation3 [shape = 's32[1]{0}', space=sflag, size = 0x4, scoped, tag = 'scoped memory for tpu_custom_call.1']
    #allocation4 [shape = 'u8[4096]{0}', space=vmem, size = 0x1000, scoped, tag = 'input window, operand 1, single buffered']
    #allocation5 [shape = 's32[1]{0}', space=sflag, size = 0x4, scoped, tag = 'scoped memory for tpu_custom_call.1']
    %7 = vsyncpa [#allocation3], 0
    %8 = vsyncpa [#allocation5], 0
    // Predicated region
    $region2: #{tpu_custom_call.1} parent=1 // pred_check
      _
    $region3: #{tpu_custom_call.1} parent=1 // pred_check_branch
      %10 = sbr.rel (0) target = $region5
    $region4: #{tpu_custom_call.1} parent=1 // pred_region
      %s12 = ssub.s32 128, 128
      %13 = vsyncadd [#allocation3], %s12
      %s15 = sshll.u32 [#allocation2], 4
      %s16 = int_to_ptr.vmem [resolvable:$true] %s15
      %18 = dma.hbm_to_vmem [thread:$0]  %s0, 128, %s16, [#allocation3]
    $region5: #{tpu_custom_call.1} parent=1 // pred_fallthru
      _
    // Predicated region
    $region6: #{tpu_custom_call.1} parent=1 // pred_check
      _
    $region7: #{tpu_custom_call.1} parent=1 // pred_check_branch
      %20 = sbr.rel (0) target = $region9
    $region8: #{tpu_custom_call.1} parent=1 // pred_region
      %s22 = ssub.s32 128, 128
      %23 = vsyncadd [#allocation5], %s22
      %s25 = sshll.u32 [#allocation4], 4
      %s26 = int_to_ptr.vmem [resolvable:$true] %s25
      %28 = dma.hbm_to_vmem [thread:$0]  %s1, 128, %s26, [#allocation5]
    $region9: #{tpu_custom_call.1} parent=1 // pred_fallthru
      _
    // Predicated region
    $region10: #{tpu_custom_call.1} parent=1 // pred_check
      _
    $region11: #{tpu_custom_call.1} parent=1 // pred_check_branch
      %30 = sbr.rel (0) target = $region13
    $region12: #{tpu_custom_call.1} parent=1 // pred_region
      %31 = dma.done [#allocation3], 128
    $region13: #{tpu_custom_call.1} parent=1 // pred_fallthru
      _
    // Predicated region
    $region14: #{tpu_custom_call.1} parent=1 // pred_check
      _
    $region15: #{tpu_custom_call.1} parent=1 // pred_check_branch
      %33 = sbr.rel (0) target = $region17
    $region16: #{tpu_custom_call.1} parent=1 // pred_region
      %34 = dma.done [#allocation5], 128
    $region17: #{tpu_custom_call.1} parent=1 // pred_fallthru
      _
    %v35 = vld [vmem:[#allocation2] sm:$0xff]
    %v36 = vld [vmem:[#allocation4] sm:$0xff]
    %37 = vmatprep.subr.mxu0 0.0
    %38 = vmatpush1.xpose.msra.mxu0 %v36
    %39 = vmatprep.subr.mxu0 0.0
    %40 = vmatpush1.xpose.msra.mxu0 0.0
    %41 = vmatprep.subr.mxu0 0.0
    %42 = vmatpush1.xpose.msra.mxu0 0.0
    %43 = vmatprep.subr.mxu0 0.0
    %44 = vmatpush1.xpose.msra.mxu0 0.0
    %45 = vmatprep.subr.mxu0 0.0
    %46 = vmatpush1.xpose.msra.mxu0 0.0
    %47 = vmatprep.subr.mxu0 0.0
    %48 = vmatpush1.xpose.msra.mxu0 0.0
    %49 = vmatprep.subr.mxu0 0.0
    %50 = vmatpush1.xpose.msra.mxu0 0.0
    %51 = vmatprep.subr.mxu0 0.0
    %52 = vmatpush1.xpose.msra.mxu0 0.0
    %53 = vmatprep.subr.mxu0 0.0
    %54 = vmatpush1.xpose.msra.mxu0 0.0
    %55 = vmatprep.subr.mxu0 0.0
    %56 = vmatpush1.xpose.msra.mxu0 0.0
    %57 = vmatprep.subr.mxu0 0.0
    %58 = vmatpush1.xpose.msra.mxu0 0.0
    %59 = vmatprep.subr.mxu0 0.0
    %60 = vmatpush1.xpose.msra.mxu0 0.0
    %61 = vmatprep.subr.mxu0 0.0
    %62 = vmatpush1.xpose.msra.mxu0 0.0
    %63 = vmatprep.subr.mxu0 0.0
    %64 = vmatpush1.xpose.msra.mxu0 0.0
    %65 = vmatprep.subr.mxu0 0.0
    %66 = vmatpush1.xpose.msra.mxu0 0.0
    %67 = vmatprep.subr.mxu0 0.0
    %68 = vmatpush1.xpose.msra.mxu0 0.0
    %69 = vmatprep.subr.mxu0 0.0
    %70 = vmatpush1.xpose.msra.mxu0 0.0
    %71 = vmatprep.subr.mxu0 0.0
    %72 = vmatpush1.xpose.msra.mxu0 0.0
    %73 = vmatprep.subr.mxu0 0.0
    %74 = vmatpush1.xpose.msra.mxu0 0.0
    %75 = vmatprep.subr.mxu0 0.0
    %76 = vmatpush1.xpose.msra.mxu0 0.0
    %77 = vmatprep.subr.mxu0 0.0
    %78 = vmatpush1.xpose.msra.mxu0 0.0
    %79 = vmatprep.subr.mxu0 0.0
    %80 = vmatpush1.xpose.msra.mxu0 0.0
    %81 = vmatprep.subr.mxu0 0.0
    %82 = vmatpush1.xpose.msra.mxu0 0.0
    %83 = vmatprep.subr.mxu0 0.0
    %84 = vmatpush1.xpose.msra.mxu0 0.0
    %85 = vmatprep.subr.mxu0 0.0
    %86 = vmatpush1.xpose.msra.mxu0 0.0
    %87 = vmatprep.subr.mxu0 0.0
    %88 = vmatpush1.xpose.msra.mxu0 0.0
    %89 = vmatprep.subr.mxu0 0.0
    %90 = vmatpush1.xpose.msra.mxu0 0.0
    %91 = vmatprep.subr.mxu0 0.0
    %92 = vmatpush1.xpose.msra.mxu0 0.0
    %93 = vmatprep.subr.mxu0 0.0
    %94 = vmatpush1.xpose.msra.mxu0 0.0
    %95 = vmatprep.subr.mxu0 0.0
    %96 = vmatpush1.xpose.msra.mxu0 0.0
    %97 = vmatprep.subr.mxu0 0.0
    %98 = vmatpush1.xpose.msra.mxu0 0.0
    %99 = vmatprep.subr.mxu0 0.0
    %100 = vmatpush1.xpose.msra.mxu0 0.0
    %101 = vmatprep.mubr.f32.mxu0 0.0
    %102 = vmatmul.mubr.f32.gmra.mrb[0].mxu0 %v35
    %v103 = vpop.f32.mrb[0].mxu0
    %v104 = vadd.f32 0.0, %v103
    %v105 = vpop.f32.mrb[0].mxu0
    %106 = vdwg.mxu0
    %v107 = vmul.f32 %v104, 10.0
    %v108 = vlaneseq
    %v109 = vshrl.u32 %v108, 7
    %s110 = smul.u32 0, 8
    %v111 = vstv %s110
    %v112 = vadd.s32 %v109, %v111
    %v113 = vlaneseq
    %v114 = vand.u32 %v113, 127
    %vm115 = vcmp.eq.s32.totalorder %v112, %v114
    %v116 = vsub.f32 %v107, 0.2
    %v117 = vsel %vm115, %v107, %v116
    %vm118 = vcmask 64512
    %v119 = vsel %vm118, %v117, -inf
    %120 = vmax.xlane.f32.xlu0 %v119
    %v121 = vpop.xlane.xlu0 %120
    %v122 = vsub.f32 %v117, %v121
    %v123 = vmul.f32 %v122, 1.442695
    %v124 = vpow.pop %v123
    %v125 = vsel %vm118, %v124, 0.0
    %126 = vadd.xlane.f32.xlu0 %v125
    %v127 = vpop.xlane.xlu0 %126
    %v128 = vlog2.pop %v127
    %v129 = vmul.f32 %v128, 0.6931472
    %v130 = vadd.f32 %v129, %v121
    %s131 = scalar_lea.vmem [#allocation4], %s110
    %v132 = vld [vmem:[%s131] sm:$0xff]
    %v133 = vmul.f32 %v35, %v132
    %134 = vadd.xlane.f32.xlu0 %v133
    %v135 = vpop.xlane.xlu0 %134
    %v136 = vmul.f32 %v135, 10.0
    %v137 = vsub.f32 %v130, %v136
    %vm138 = vcmask 7168
    %139 = vst.msk [vmem:[%s2] sm:$0xff] %vm138, %v137
    // Predicated region
    $region18: #{tpu_custom_call.1} parent=1 // pred_check
      _
    $region19: #{tpu_custom_call.1} parent=1 // pred_check_branch
      %141 = sbr.rel (0) target = $region21
    $region20: #{tpu_custom_call.1} parent=1 // pred_region
      _
    $region21: #{tpu_custom_call.1} parent=1 // pred_fallthru
      _
    // Predicated region
    $region22: #{tpu_custom_call.1} parent=1 // pred_check
      _
    $region23: #{tpu_custom_call.1} parent=1 // pred_check_branch
      %143 = sbr.rel (0) target = $region25
    $region24: #{tpu_custom_call.1} parent=1 // pred_region
      _
    $region25: #{tpu_custom_call.1} parent=1 // pred_fallthru
      _
    %144 = vsyncpa [#allocation3], 1
    %145 = vsyncpa [#allocation5], 1

</llo_original>
